<compile_context>
chip_gen: v5e
topology: v5e:2x2
jax: 0.10.0
libtpu: 0.0.40
codegen_flags: <defaults>
</compile_context>

<pallas_src>
import functools
import numpy as np
import jax
import jax.numpy as jnp
from jax import lax
from jax.experimental import pallas as pl
from jax.experimental.pallas import tpu as pltpu


# ------------------------------- helpers ------------------------------------

def _round_up(n, m):
    return ((n + m - 1) // m) * m


def _pad_axis(x, axis, target):
    pad = target - x.shape[axis]
    if pad <= 0:
        return x
    widths = [(0, 0)] * x.ndim
    widths[axis] = (0, pad)
    return jnp.pad(x, widths)


def _seq_tile(length_padded):
    return 256 if length_padded % 256 == 0 else 128


def _vmem_limit(per_step_bytes):
    """Per-step footprint (+slack), clamped to this generation's capacity."""
    try:
        cap = pltpu.get_tpu_info().vmem_capacity_bytes
    except Exception:
        cap = 64 * 1024 * 1024                     # conservative (v7x per-TC)
    want = 2 * int(per_step_bytes) + (2 << 20)
    return int(max(16 << 20, min(want, (cap * 3) // 4)))


def _const_spec(shape):
    zeros = (0,) * len(shape)
    return pl.BlockSpec(shape, lambda *_: zeros)


# --------------------- stage 1: 1x1-conv projection kernel ------------------

def _proj_kernel(x_ref, w_ref, b_ref, o_ref, *, scale):
    f32 = jnp.float32
    x = x_ref[0].astype(jnp.bfloat16)                       # (D, tl)
    # Contract channel axis (dim 0) with dim 0 of the (C_in, C_out) weight.
    y = lax.dot_general(x, w_ref[...], (((0,), (0,)), ((), ())),
                        preferred_element_type=f32)         # (tl, D)
    y = y + b_ref[...]
    if scale != 1.0:
        y = y * f32(scale)                                  # fold 1/sqrt(dh)
    o_ref[0] = y.astype(o_ref.dtype)


def _project_ncl(x, w_t, b_row, scale):
    """x: (B, D, Lp) f32 -> (B, Lp, D) bf16 via a 1x1 conv (+optional scale)."""
    B, D, Lp = x.shape
    tl = _seq_tile(Lp)
    nl = Lp // tl
    per_step = (2 * D * tl * 4 +       # f32 input double-buffer
                2 * D * D * 2 +        # bf16 weight (double-buffered)
                2 * D * 4 +            # bias
                2 * tl * D * 2 +       # bf16 output double-buffer
                2 * tl * D * 4)        # f32 intermediates
    return pl.pallas_call(
        functools.partial(_proj_kernel, scale=float(scale)),
        out_shape=jax.ShapeDtypeStruct((B, Lp, D), jnp.bfloat16),
        grid=(B, nl),
        in_specs=[
            pl.BlockSpec((1, D, tl), lambda b, l: (b, 0, l)),   # NCL input tile
            _const_spec((D, D)),                                # weight
            _const_spec((1, D)),                                # bias row
        ],
        out_specs=pl.BlockSpec((1, tl, D), lambda b, l: (b, l, 0)),
        compiler_params=pltpu.CompilerParams(
            dimension_semantics=("parallel", "parallel"),
            vmem_limit_bytes=_vmem_limit(per_step)),
    )(x, w_t, b_row)


# ------------------ stage 2: per-head attention + fused merge ---------------

def _mha_attn_kernel(q_ref, k_ref, v_ref, *rest, num_heads, head_dim,
                     has_mask, kv_valid, kv_padded):
    f32 = jnp.float32
    bf16 = jnp.bfloat16
    if has_mask:
        mask_ref, wm_ref, bm_ref, out_ref, stage_ref = rest
    else:
        wm_ref, bm_ref, out_ref, stage_ref = rest

    q = q_ref[0]        # (tq, D) bf16, already scaled by 1/sqrt(head_dim)
    k = k_ref[0]        # (Mp, D) bf16
    v = v_ref[0]        # (Mp, D) bf16
    tq = q.shape[0]

    # Additive score bias, computed ONCE per tile (hoisted out of head loop).
    # Finite -1e9 instead of -inf keeps fully-masked rows NaN-free (uniform
    # softmax) -- intentional divergence from the torch reference.
    if has_mask:
        bias = jnp.where(mask_ref[0] == 0, f32(-1e9), f32(0.0))       # (tq, Mp)
    elif kv_padded > kv_valid:
        col = lax.broadcasted_iota(jnp.int32, (tq, kv_padded), 1)
        bias = jnp.where(col < kv_valid, f32(0.0), f32(-1e9))
    else:
        bias = None

    for h in range(num_heads):                  # num_heads is small & static
        lo = h * head_dim
        qh = q[:, lo:lo + head_dim]             # (tq, dh) bf16
        kh = k[:, lo:lo + head_dim]             # (Mp, dh) bf16
        vh = v[:, lo:lo + head_dim]             # (Mp, dh) bf16

        # scores = qh @ kh^T  (bf16 x bf16 -> f32 accumulate on the MXU)
        s = lax.dot_general(qh, kh, (((1,), (1,)), ((), ())),
                            preferred_element_type=f32)               # (tq, Mp)
        if bias is not None:
            s = s + bias

        m = jnp.max(s, axis=-1, keepdims=True)
        e = jnp.exp(s - m)
        l = jnp.sum(e, axis=-1, keepdims=True)

        # Deferred normalization: un-normalized PV matmul, then scale only the
        # small (tq, dh) result (instead of the full (tq, Mp) weights) with an
        # exact reciprocal.
        oh = jnp.dot(e.astype(bf16), vh, preferred_element_type=f32)  # (tq, dh)
        oh = oh * pl.reciprocal(l, approx=False)

        # Stage the head output at its static column slice (head-major).
        stage_ref[:, lo:lo + head_dim] = oh.astype(bf16)

    # ONE D-deep merge matmul (vs. H head_dim-deep ones), producing the result
    # directly in the transposed (D, tq) NCL layout -> no wrapper transpose.
    merged_t = lax.dot_general(wm_ref[...], stage_ref[...],
                               (((0,), (1,)), ((), ())),
                               preferred_element_type=f32)             # (D, tq)
    out_ref[0] = (merged_t + bm_ref[...]).astype(out_ref.dtype)


# -------------------------------- wrapper ------------------------------------

def multi_headed_attention(query, key, value, mask, params, *, num_heads):
    """query: (B, D, N), key/value: (B, D, M), mask: (B, N, M) or None.

    Returns (B, D, N) -- same layout/semantics as the PyTorch module.
    """
    Wq, bq, Wk, bk, Wv, bv, Wm, bm = params
    B, D, N = query.shape
    M = key.shape[2]
    head_dim = D // num_heads
    scale = 1.0 / float(head_dim) ** 0.5
    bf16 = jnp.bfloat16
    f32 = jnp.float32
    out_dtype = query.dtype

    # Pad sequence lengths to multiples of 128 (alignment / tiling / lane-dense
    # stores); the padding is masked out of softmax and sliced off at the end.
    Np = _round_up(N, 128)
    Mp = _round_up(M, 128)

    # Permute channels so each head is a contiguous head_dim slice
    # (torch channel c = d*H + h  ->  head-major position h*head_dim + d).
    perm = np.arange(D).reshape(head_dim, num_heads).T.reshape(-1)

    def proj_w(W, b):   # Conv1d weight (C_out, C_in) -> (C_in, C_out), permuted
        return (jnp.asarray(W).T[:, perm].astype(bf16),
                jnp.asarray(b)[perm].reshape(1, D).astype(f32))

    WqT, bqr = proj_w(Wq, bq)
    WkT, bkr = proj_w(Wk, bk)
    WvT, bvr = proj_w(Wv, bv)
    WmT = jnp.asarray(Wm).T[perm, :].astype(bf16)      # permute *input* channels
    bmr = jnp.asarray(bm).reshape(D, 1).astype(f32)    # column bias for (D, tq)

    q_in = _pad_axis(query.astype(f32), 2, Np)
    k_in = _pad_axis(key.astype(f32), 2, Mp)
    v_in = _pad_axis(value.astype(f32), 2, Mp)

    # ---- stage 1: q/k/v projections, tiled over (B, L) ---------------------
    q = _project_ncl(q_in, WqT, bqr, scale)    # (B, Np, D) bf16, pre-scaled
    k = _project_ncl(k_in, WkT, bkr, 1.0)      # (B, Mp, D) bf16
    v = _project_ncl(v_in, WvT, bvr, 1.0)      # (B, Mp, D) bf16

    # ---- stage 2: attention + fused merge, tiled over the query axis -------
    tq = _seq_tile(Np)
    nq = Np // tq

    has_mask = mask is not None
    if has_mask:
        mask_i8 = (mask != 0).astype(jnp.int8)          # 4x less DMA than f32
        mask_i8 = _pad_axis(_pad_axis(mask_i8, 1, Np), 2, Mp)

    # K/V are reused across query tiles: single-buffer them only when that
    # reuse actually exists (halves their VMEM footprint); otherwise keep the
    # default double-buffering so the per-batch refetch overlaps with compute.
    if nq > 1:
        kv_spec = pl.BlockSpec((1, Mp, D), lambda b, i: (b, 0, 0),
                               pipeline_mode=pl.Buffered(1))
        kv_bufs = 1
    else:
        kv_spec = pl.BlockSpec((1, Mp, D), lambda b, i: (b, 0, 0))
        kv_bufs = 2

    in_specs = [
        pl.BlockSpec((1, tq, D), lambda b, i: (b, i, 0)),   # q tile
        kv_spec,                                            # k (full source len)
        kv_spec,                                            # v (full source len)
    ]
    args = [q, k, v]
    if has_mask:
        in_specs.append(pl.BlockSpec((1, tq, Mp), lambda b, i: (b, i, 0)))
        args.append(mask_i8)
    in_specs += [_const_spec((D, D)), _const_spec((D, 1))]
    args += [WmT, bmr]

    out_bytes = np.dtype(out_dtype).itemsize
    per_step = (2 * tq * D * 2 +                     # q double-buffer (bf16)
                2 * kv_bufs * Mp * D * 2 +           # k + v (bf16)
                (2 * tq * Mp if has_mask else 0) +   # int8 mask
                2 * D * D * 2 + 2 * D * 4 +          # merge weight + bias
                2 * D * tq * out_bytes +             # output double-buffer
                tq * D * 2 +                         # staging scratch (bf16)
                4 * tq * Mp * 4)                     # f32 score/exp/bias temps

    out = pl.pallas_call(
        functools.partial(_mha_attn_kernel, num_heads=num_heads,
                          head_dim=head_dim, has_mask=has_mask,
                          kv_valid=M, kv_padded=Mp),
        out_shape=jax.ShapeDtypeStruct((B, D, Np), out_dtype),
        grid=(B, nq),
        in_specs=in_specs,
        out_specs=pl.BlockSpec((1, D, tq), lambda b, i: (b, 0, i)),
        scratch_shapes=[pltpu.VMEM((tq, D), bf16)],
        compiler_params=pltpu.CompilerParams(
            dimension_semantics=("parallel", "parallel"),
            vmem_limit_bytes=_vmem_limit(per_step)),
    )(*args)

    return out[:, :, :N]


# --------------------------- pure-JAX reference ------------------------------

def reference_forward(query, key, value, mask, params, *, num_heads):
    Wq, bq, Wk, bk, Wv, bv, Wm, bm = params
    B, D, N = query.shape
    dim = D // num_heads

    def conv1(W, b, t):
        return jnp.einsum('oc,bcl->bol', W, t) + b[None, :, None]

    q = conv1(Wq, bq, query).reshape(B, dim, num_heads, -1)
    k = conv1(Wk, bk, key).reshape(B, dim, num_heads, -1)
    v = conv1(Wv, bv, value).reshape(B, dim, num_heads, -1)

    scores = jnp.einsum('bdhn,bdhm->bhnm', q, k) / (dim ** 0.5)
    if mask is not None:
        scores = jnp.where(mask[:, None, :, :] == 0, -jnp.inf, scores)
    prob = jax.nn.softmax(scores, axis=-1)
    x = jnp.einsum('bhnm,bdhm->bdhn', prob, v).reshape(B, D, -1)
    return conv1(Wm, bm, x)


# ---------------------------------- main --------------------------------------

if __name__ == "__main__":
    B, D, H = 2, 32, 4        # d_model=32, num_heads=4, head_dim=8
    N, M = 16, 24             # query / source lengths (exercise padding + N!=M)

    root = jax.random.PRNGKey(0)
    keys = jax.random.split(root, 16)

    query = jax.random.normal(keys[0], (B, D, N), jnp.float32)
    key_t = jax.random.normal(keys[1], (B, D, M), jnp.float32)
    value = jax.random.normal(keys[2], (B, D, M), jnp.float32)
    mask = (jax.random.uniform(keys[3], (B, N, M)) > 0.3).astype(jnp.float32)
    mask = mask.at[..., 0].set(1.0)   # keep >=1 valid key per query (ref uses -inf)

    def w(k, co, ci, s=0.2):
        return jax.random.normal(k, (co, ci), jnp.float32) * s

    def b(k, co, s=0.1):
        return jax.random.normal(k, (co,), jnp.float32) * s

    params = (
        w(keys[4], D, D), b(keys[5], D),      # proj q
        w(keys[6], D, D), b(keys[7], D),      # proj k
        w(keys[8], D, D), b(keys[9], D),      # proj v
        w(keys[10], D, D), b(keys[11], D),    # merge
    )

    # Masked path.
    out = jax.block_until_ready(
        multi_headed_attention(query, key_t, value, mask, params, num_heads=H))
    ref = jax.block_until_ready(
        reference_forward(query, key_t, value, mask, params, num_heads=H))
    assert out.shape == (B, D, N), out.shape
    np.testing.assert_allclose(np.asarray(out), np.asarray(ref),
                               rtol=5e-2, atol=5e-2)

    # Unmasked path (separate, leaner kernel variant: no mask DMA / bias).
    out_nm = jax.block_until_ready(
        multi_headed_attention(query, key_t, value, None, params, num_heads=H))
    ref_nm = jax.block_until_ready(
        reference_forward(query, key_t, value, None, params, num_heads=H))
    np.testing.assert_allclose(np.asarray(out_nm), np.asarray(ref_nm),
                               rtol=5e-2, atol=5e-2)

    print("KERNEL_OK")
</pallas_src>

<mosaic_0001>
module attributes {stable_mosaic.version = 11 : i64} {
  func.func @_proj_kernel(%arg0: i32, %arg1: i32, %arg2: memref<1x32x128xf32, #tpu.memory_space<vmem>>, %arg3: memref<32x32xbf16, #tpu.memory_space<vmem>>, %arg4: memref<1x32xf32, #tpu.memory_space<vmem>>, %arg5: memref<1x128x32xbf16, #tpu.memory_space<vmem>>) attributes {dimension_semantics = [#tpu.dimension_semantics<parallel>, #tpu.dimension_semantics<parallel>], iteration_bounds = array<i64: 2, 1>, scalar_prefetch = 0 : i64, scratch_operands = 0 : i64, tpu.core_type = #tpu.core_type<tc>, window_params = [{transform_indices = @transform_0, window_bounds = array<i64: 1, 32, 128>}, {pipeline_mode = #tpu.pipeline_mode<synchronous>, transform_indices = @transform_1, window_bounds = array<i64: 32, 32>}, {pipeline_mode = #tpu.pipeline_mode<synchronous>, transform_indices = @transform_2, window_bounds = array<i64: 1, 32>}, {transform_indices = @transform_3, window_bounds = array<i64: 1, 128, 32>}]} {
    %c0 = arith.constant 0 : index
    %c0_0 = arith.constant 0 : index
    %c0_1 = arith.constant 0 : index
    %0 = vector.load %arg2[%c0, %c0_0, %c0_1] : memref<1x32x128xf32, #tpu.memory_space<vmem>>, vector<1x32x128xf32>
    %1 = vector.shape_cast %0 : vector<1x32x128xf32> to vector<32x128xf32>
    %2 = arith.truncf %1 : vector<32x128xf32> to vector<32x128xbf16>
    %c0_2 = arith.constant 0 : index
    %c0_3 = arith.constant 0 : index
    %3 = vector.load %arg3[%c0_2, %c0_3] : memref<32x32xbf16, #tpu.memory_space<vmem>>, vector<32x32xbf16>
    %cst = arith.constant dense<0.000000e+00> : vector<128x32xf32>
    %4 = tpu.matmul %2, %3, %cst {dimension_numbers = #tpu.dot_dimension_numbers<[0], [0], [1], [1], [0, 1, 1, 1], [], []>} : vector<32x128xbf16>, vector<32x32xbf16>, vector<128x32xf32> -> vector<128x32xf32>
    %c0_4 = arith.constant 0 : index
    %c0_5 = arith.constant 0 : index
    %5 = vector.load %arg4[%c0_4, %c0_5] : memref<1x32xf32, #tpu.memory_space<vmem>>, vector<1x32xf32>
    %6 = vector.broadcast %5 : vector<1x32xf32> to vector<128x32xf32>
    %7 = arith.addf %4, %6 : vector<128x32xf32>
    %cst_6 = arith.constant 0.353553385 : f32
    %8 = vector.broadcast %cst_6 : f32 to vector<128x32xf32>
    %9 = arith.mulf %7, %8 : vector<128x32xf32>
    %10 = arith.truncf %9 : vector<128x32xf32> to vector<128x32xbf16>
    %c0_7 = arith.constant 0 : index
    %c0_8 = arith.constant 0 : index
    %c0_9 = arith.constant 0 : index
    %11 = vector.load %arg5[%c0_7, %c0_8, %c0_9] : memref<1x128x32xbf16, #tpu.memory_space<vmem>>, vector<1x128x32xbf16>
    %12 = vector.shape_cast %11 : vector<1x128x32xbf16> to vector<128x32xbf16>
    %13 = vector.shape_cast %10 : vector<128x32xbf16> to vector<1x128x32xbf16>
    tpu.vector_store %arg5[%c0_7, %c0_8, %c0_9], %13 {strides = array<i32>} : memref<1x128x32xbf16, #tpu.memory_space<vmem>>, vector<1x128x32xbf16>,
    return
  }
  func.func @transform_0(%arg0: i32, %arg1: i32) -> (i32, i32, i32) {
    %c0_i32 = arith.constant 0 : i32
    %c0_i32_0 = arith.constant 0 : i32
    return %arg0, %c0_i32, %arg1 : i32, i32, i32
  }
  func.func @transform_1(%arg0: i32, %arg1: i32) -> (i32, i32) {
    %c0_i32 = arith.constant 0 : i32
    %c0_i32_0 = arith.constant 0 : i32
    %c0_i32_1 = arith.constant 0 : i32
    return %c0_i32, %c0_i32_0 : i32, i32
  }
  func.func @transform_2(%arg0: i32, %arg1: i32) -> (i32, i32) {
    %c0_i32 = arith.constant 0 : i32
    %c0_i32_0 = arith.constant 0 : i32
    %c0_i32_1 = arith.constant 0 : i32
    return %c0_i32, %c0_i32_0 : i32, i32
  }
  func.func @transform_3(%arg0: i32, %arg1: i32) -> (i32, i32, i32) {
    %c0_i32 = arith.constant 0 : i32
    %c0_i32_0 = arith.constant 0 : i32
    return %arg0, %arg1, %c0_i32 : i32, i32, i32
  }
}

</mosaic_0001>

<llo_original>
// kernel: tpu_custom_call.1
$region0: #{tpu_custom_call.1}
  #allocation0 [shape = 'u32[]', space=smem, size = 0x4, offset = 0x4, fixed_abs, tag = 'smem constant byte address 0x4 - core index']
  #allocation1 [shape = 'u32[72,128]{1,0:T(1,128)}', space=vmem, size = 0x9000, scoped, tag = 'internal scratch']
  %s0 = inlined_call_operand.hbm [shape: f32[2,32,128], index: 0, kind: input, shape index: {}]
  %s1 = inlined_call_operand.hbm [shape: bf16[32,32], index: 1, kind: input, shape index: {}]
  %s2 = inlined_call_operand.vmem [shape: f32[1,32], index: 2, kind: input, shape index: {}]
  %s3 = inlined_call_operand.vmem [shape: bf16[2,128,32], index: 3, kind: output, shape index: {}]
  %s4 = sld [smem:[#allocation0]]
  $region53: #{tpu_custom_call.1} parent=0
    _
  %s6 = ssub.s32 1, %s4
  %s7 = scalar_select 0, %s6, %s4
  $region1: #{tpu_custom_call.1} parent=0
    #allocation2 [shape = 'u8[32768]{0}', space=vmem, size = 0x8000, scoped, tag = 'input window, operand 0']
    #allocation3 [shape = 's32[2]{0}', space=sflag, size = 0x8, scoped, tag = 'scoped memory for tpu_custom_call.1']
    #allocation4 [shape = 'u8[8192]{0}', space=vmem, size = 0x2000, scoped, tag = 'input window, operand 1, single buffered']
    #allocation5 [shape = 's32[1]{0}', space=sflag, size = 0x4, scoped, tag = 'scoped memory for tpu_custom_call.1']
    %8 = vsyncpa [#allocation3], 0
    %s9 = scalar_lea.sflag [#allocation3], 1
    %10 = vsyncpa %s9, 0
    %11 = vsyncpa [#allocation5], 0
    loop: start=0, step=1, limit=4
    $region2: #{tpu_custom_call.1} parent=1 // loop_pre_header
      _
    $region3: #{tpu_custom_call.1} parent=1 // loop_header
      %s13 = sphi 0, %s17
      %p14 = scmp.ge.s32.totalorder %s13, 4
      %s20 = sphi 0, %s32
      %s21 = sphi 0, %s28
      %s22 = sphi 0, %s20
      %s23 = sphi 0, %s21
      %s24 = sphi 0, %s22
      %s25 = sphi 0, %s23
      %s37 = sphi 0, %s39
      %s40 = sphi 0, %s37
      %s41 = sphi 0, %s40
      %s57 = sphi 0, %s41
      %s61 = sphi 0, %s61
      %s63 = sphi 0, %s61
      %s64 = sphi 0, %s63
      %s78 = sphi 0, %s64
      %s82 = sphi 0, %s82
      %s84 = sphi 0, %s82
      %s85 = sphi 0, %s84
      %s99 = sphi 0, %s85
      %s107 = sphi 0, %s109
      %s110 = sphi 0, %s107
      %s111 = sphi 0, %s110
      %s127 = sphi 0, %s111
    $region4: #{tpu_custom_call.1} parent=1 // loop_header_branch
      %16 = sbr.rel (%p14) target = $region8
    $region5: #{tpu_custom_call.1} parent=1 // loop_body
      %s18 = ssub.s32 %s13, 1
      %s19 = ssub.s32 %s13, 2
      %s26 = sadd.s32 1, %s21
      %p27 = scmp.ge.s32.totalorder %s26, 1
      %s28 = scalar_select %p27, 0, %s26
      %s29 = sadd.s32 1, %s20
      %s30 = scalar_select %p27, %s29, %s20
      %p31 = scmp.ge.s32.totalorder %s30, 2
      %s32 = scalar_select %p31, 0, %s30
      %s33 = ssub.s32 %s20, %s32
      %s34 = ssub.s32 %s21, %s28
      %s35 = sor.u32 %s33, %s34
      %p36 = scmp.eq.s32.totalorder %s35, 0
      %s38 = sadd.s32 %s37, 1
      %s39 = scalar_select %p36, %s37, %s38
      %p42 = pneg %p36
      %p43 = scmp.eq.s32.totalorder %s13, 1
      %p44 = por %p42, %p43
      %p45 = scmp.ne.s32.totalorder %s37, %s40
      %p46 = scmp.eq.s32.totalorder %s13, 0
      %p47 = por %p45, %p46
      %p48 = scmp.ne.s32.totalorder %s37, %s40
      %p49 = scmp.eq.s32.totalorder %s18, 1
      %p50 = por %p48, %p49
      %p51 = scmp.ne.s32.totalorder %s40, %s41
      %p52 = scmp.eq.s32.totalorder %s18, 0
      %p53 = por %p51, %p52
      %p54 = scmp.ne.s32.totalorder %s40, %s41
      %p55 = scmp.eq.s32.totalorder %s19, 1
      %p56 = por %p54, %p55
      %p58 = scmp.ne.s32.totalorder %s41, %s57
      %p59 = scmp.eq.s32.totalorder %s19, 0
      %p60 = por %p58, %p59
      %s62 = sadd.s32 %s61, 1
      %p65 = scmp.eq.s32.totalorder %s13, 1
      %p66 = scmp.ne.s32.totalorder %s61, %s63
      %p67 = scmp.eq.s32.totalorder %s13, 0
      %p68 = por %p66, %p67
      %p69 = scmp.ne.s32.totalorder %s61, %s63
      %p70 = scmp.eq.s32.totalorder %s18, 1
      %p71 = por %p69, %p70
      %p72 = scmp.ne.s32.totalorder %s63, %s64
      %p73 = scmp.eq.s32.totalorder %s18, 0
      %p74 = por %p72, %p73
      %p75 = scmp.ne.s32.totalorder %s63, %s64
      %p76 = scmp.eq.s32.totalorder %s19, 1
      %p77 = por %p75, %p76
      %p79 = scmp.ne.s32.totalorder %s64, %s78
      %p80 = scmp.eq.s32.totalorder %s19, 0
      %p81 = por %p79, %p80
      %s83 = sadd.s32 %s82, 1
      %p86 = scmp.eq.s32.totalorder %s13, 1
      %p87 = scmp.ne.s32.totalorder %s82, %s84
      %p88 = scmp.eq.s32.totalorder %s13, 0
      %p89 = por %p87, %p88
      %p90 = scmp.ne.s32.totalorder %s82, %s84
      %p91 = scmp.eq.s32.totalorder %s18, 1
      %p92 = por %p90, %p91
      %p93 = scmp.ne.s32.totalorder %s84, %s85
      %p94 = scmp.eq.s32.totalorder %s18, 0
      %p95 = por %p93, %p94
      %p96 = scmp.ne.s32.totalorder %s84, %s85
      %p97 = scmp.eq.s32.totalorder %s19, 1
      %p98 = por %p96, %p97
      %p100 = scmp.ne.s32.totalorder %s85, %s99
      %p101 = scmp.eq.s32.totalorder %s19, 0
      %p102 = por %p100, %p101
      %s103 = ssub.s32 %s20, %s32
      %s104 = ssub.s32 %s21, %s28
      %s105 = sor.u32 %s103, %s104
      %p106 = scmp.eq.s32.totalorder %s105, 0
      %s108 = sadd.s32 %s107, 1
      %s109 = scalar_select %p106, %s107, %s108
      %p112 = pneg %p106
      %p113 = scmp.eq.s32.totalorder %s13, 1
      %p114 = por %p112, %p113
      %p115 = scmp.ne.s32.totalorder %s107, %s110
      %p116 = scmp.eq.s32.totalorder %s13, 0
      %p117 = por %p115, %p116
      %p118 = scmp.ne.s32.totalorder %s107, %s110
      %p119 = scmp.eq.s32.totalorder %s18, 1
      %p120 = por %p118, %p119
      %p121 = scmp.ne.s32.totalorder %s110, %s111
      %p122 = scmp.eq.s32.totalorder %s18, 0
      %p123 = por %p121, %p122
      %p124 = scmp.ne.s32.totalorder %s110, %s111
      %p125 = scmp.eq.s32.totalorder %s19, 1
      %p126 = por %p124, %p125
      %p128 = scmp.ne.s32.totalorder %s111, %s127
      %p129 = scmp.eq.s32.totalorder %s19, 0
      %p130 = por %p128, %p129
      %p131 = scmp.le.s32.totalorder 1, %s13
      %p132 = scmp.lt.s32.totalorder %s13, 3
      %p133 = pnand %p131, %p132
      %p134 = pneg %p133
      // Predicated region
      $region9: #{tpu_custom_call.1} parent=5 // pred_check
        _
      $region10: #{tpu_custom_call.1} parent=5 // pred_check_branch
        %136 = sbr.rel (%p133) target = $region12
      $region11: #{tpu_custom_call.1} parent=5 // pred_region
        %s137 = ssub.s32 %s13, 1
        // Predicated region
        $region13: #{tpu_custom_call.1} parent=11 // pred_check
          %p138 = pneg %p74
        $region14: #{tpu_custom_call.1} parent=11 // pred_check_branch
          %140 = sbr.rel (%p138) target = $region16
        $region15: #{tpu_custom_call.1} parent=11 // pred_region
          %142 = vsyncadd [#allocation5], 0
          %s143 = sshll.u32 %s1, 4
          %s144 = int_to_ptr.hbm [resolvable:$true] %s143
          %s145 = sshll.u32 [#allocation4], 4
          %s146 = int_to_ptr.vmem [resolvable:$true] %s145
          %151 = dma.hbm_to_vmem [thread:$0]  %s144, 256, %s146, [#allocation5], 64, 64, 4
        $region16: #{tpu_custom_call.1} parent=11 // pred_fallthru
          _
        // Predicated region
        $region17: #{tpu_custom_call.1} parent=11 // pred_check
          %p152 = pneg %p95
        $region18: #{tpu_custom_call.1} parent=11 // pred_check_branch
          %154 = sbr.rel (%p152) target = $region20
        $region19: #{tpu_custom_call.1} parent=11 // pred_region
          _
        $region20: #{tpu_custom_call.1} parent=11 // pred_fallthru
          _
      $region12: #{tpu_custom_call.1} parent=5 // pred_fallthru
        _
      %p155 = scmp.lt.s32.totalorder %s13, 2
      // Predicated region
      $region21: #{tpu_custom_call.1} parent=5 // pred_check
        %p156 = pneg %p155
      $region22: #{tpu_custom_call.1} parent=5 // pred_check_branch
        %158 = sbr.rel (%p156) target = $region24
      $region23: #{tpu_custom_call.1} parent=5 // pred_region
        // Predicated region
        $region25: #{tpu_custom_call.1} parent=23 // pred_check
          %p159 = pneg %p47
        $region26: #{tpu_custom_call.1} parent=23 // pred_check_branch
          %161 = sbr.rel (%p159) target = $region28
        $region27: #{tpu_custom_call.1} parent=23 // pred_region
          %s162 = sand.u32 %s37, 1
          %s163 = scalar_lea.sflag [#allocation3], %s162
          %s164 = sand.u32 %s37, 1
          %s165 = smul.addr %s164, 32
          %s166 = scalar_lea.vmem [#allocation2], %s165
          %168 = vsyncadd %s163, 0
          %s169 = smul.addr %s20, 4
          %s170 = sadd.s32 %s21, %s169
          %s171 = smul.addr %s170, 8
          %s172 = scalar_lea.hbm %s0, %s171
          %s173 = sshll.u32 %s172, 4
          %s174 = int_to_ptr.hbm [resolvable:$true] %s173
          %s175 = sshll.u32 %s166, 4
          %s176 = int_to_ptr.vmem [resolvable:$true] %s175
          %181 = dma.hbm_to_vmem [thread:$0]  %s174, 512, %s176, %s163, 128, 128, 8
        $region28: #{tpu_custom_call.1} parent=23 // pred_fallthru
          _
      $region24: #{tpu_custom_call.1} parent=5 // pred_fallthru
        _
      %p182 = scmp.le.s32.totalorder 1, %s13
      %p183 = scmp.lt.s32.totalorder %s13, 3
      %p184 = pnand %p182, %p183
      %p185 = pneg %p184
      // Predicated region
      $region29: #{tpu_custom_call.1} parent=5 // pred_check
        _
      $region30: #{tpu_custom_call.1} parent=5 // pred_check_branch
        %187 = sbr.rel (%p184) target = $region32
      $region31: #{tpu_custom_call.1} parent=5 // pred_region
        %s188 = ssub.s32 %s13, 1
        %s189 = sand.u32 %s40, 1
        %s190 = scalar_lea.sflag [#allocation3], %s189
        %s191 = sand.u32 %s40, 1
        %s192 = smul.addr %s191, 32
        %s193 = scalar_lea.vmem [#allocation2], %s192
        // Predicated region
        $region33: #{tpu_custom_call.1} parent=31 // pred_check
          %p194 = pneg %p53
        $region34: #{tpu_custom_call.1} parent=31 // pred_check_branch
          %196 = sbr.rel (%p194) target = $region36
        $region35: #{tpu_custom_call.1} parent=31 // pred_region
          %198 = dma.done %s190, 512
        $region36: #{tpu_custom_call.1} parent=31 // pred_fallthru
          _
        // Predicated region
        $region37: #{tpu_custom_call.1} parent=31 // pred_check
          %p199 = pneg %p74
        $region38: #{tpu_custom_call.1} parent=31 // pred_check_branch
          %201 = sbr.rel (%p199) target = $region40
        $region39: #{tpu_custom_call.1} parent=31 // pred_region
          %203 = dma.done [#allocation5], 256
        $region40: #{tpu_custom_call.1} parent=31 // pred_fallthru
          _
        %s204 = sand.u32 %s40, 1
        %s205 = scalar_lea.sflag [#allocation3], %s204
        %s206 = sand.u32 %s40, 1
        %s207 = smul.addr %s206, 32
        %s208 = scalar_lea.vmem [#allocation2], %s207
        %p209 = pneg %p53
        %p210 = pneg %p50
        %p211 = pneg %p74
        %p212 = pneg %p71
        %p213 = pneg %p95
        %p214 = pneg %p92
        %p215 = pneg %p123
        %p216 = pneg %p120
        %s217 = smul.u32 16, %s23
        %p218 = scmp.lt.s32.totalorder %s22, 1
        %s219 = scalar_select %p218, %s22, 1
        %p220 = scmp.lt.s32.totalorder %s217, 15
        %s221 = scalar_select %p220, %s217, 15
        %s222 = smul.addr %s219, 16
        %s223 = sadd.s32 %s221, %s222
        %s224 = smul.addr %s223, 4
        %s225 = scalar_lea.vmem %s3, %s224
        %s226 = smul.u32 16, %s23
        %p227 = scmp.lt.s32.totalorder %s22, 1
        %s228 = scalar_select %p227, %s22, 1
        %p229 = scmp.lt.s32.totalorder %s226, 15
        %s230 = scalar_select %p229, %s226, 15
        %s231 = smul.addr %s228, 16
        %s232 = sadd.s32 %s230, %s231
        %s233 = smul.addr %s232, 4
        %s234 = scalar_lea.vmem %s3, %s233
        %s235 = smul.u32 16, %s23
        %v237 = vld [vmem:[%s193] sm:$0xff]
        %v238 = vld [vmem:[%s193 + $0x8] sm:$0xff]
        %v239 = vld [vmem:[%s193 + $0x10] sm:$0xff]
        %v240 = vld [vmem:[%s193 + $0x18] sm:$0xff]
        %v241 = vpack.c.bf16 %v238, %v237
        %v242 = vpack.c.bf16 %v240, %v239
        %v243 = vld [vmem:[#allocation4] sm:$0xf]
        %v244 = vld [vmem:[#allocation4 + $0x4] sm:$0xf]
        %v245 = vld [vmem:[#allocation4 + $0x8] sm:$0xf]
        %v246 = vld [vmem:[#allocation4 + $0xc] sm:$0xf]
        %v247 = vld [vmem:[%s2] sm:$0x1]
        %v249 = vperm.slane %v247, 0
        %251 = vxpose.xlu0.c.b16.start [1/8] %v241, 128
        %252 = vxpose.xlu0.c.b16.cont [2/8] %v242, 128
        %253 = vxpose.xlu0.c.b16.cont [3/8] 0, 128
        %254 = vxpose.xlu0.c.b16.cont [4/8] 0, 128
        %255 = vxpose.xlu0.c.b16.cont [5/8] 0, 128
        %256 = vxpose.xlu0.c.b16.cont [6/8] 0, 128
        %257 = vxpose.xlu0.c.b16.cont [7/8] 0, 128
        %258 = vxpose.xlu0.c.b16.end [8/8] 0, 128
        %v259 = vpop.trf.xlu0
        %v260 = vpop.trf.xlu0
        %v261 = vpop.trf.xlu0
        %v262 = vpop.trf.xlu0
        %v263 = vpop.trf.xlu0
        %v264 = vpop.trf.xlu0
        %v265 = vpop.trf.xlu0
        %v266 = vpop.trf.xlu0
        %v271 = vunpack.c.l.b16 %v243
        %v272 = vunpack.c.l.b16 %v244
        %v273 = vunpack.c.l.b16 %v245
        %v274 = vunpack.c.l.b16 %v246
        %v275 = vpack.c.b16 %v272, %v271
        %v276 = vpack.c.b16 %v274, %v273
        %vm279 = vcmask 261120
        %v281 = vsel %vm279, %v259, 0
        %v284 = vsel %vm279, %v260, 0
        %v287 = vsel %vm279, %v261, 0
        %v290 = vsel %vm279, %v262, 0
        %v293 = vsel %vm279, %v263, 0
        %v296 = vsel %vm279, %v264, 0
        %v299 = vsel %vm279, %v265, 0
        %v302 = vsel %vm279, %v266, 0
        %304 = vmatpush.bf16.msra.mxu0 0
        %305 = vmatpush.bf16.msra.mxu0 0
        %306 = vmatpush.bf16.msra.mxu0 0
        %307 = vmatpush.bf16.msra.mxu0 0
        %308 = vmatpush.bf16.msra.mxu0 0
        %309 = vmatpush.bf16.msra.mxu0 0
        %310 = vmatpush.bf16.msra.mxu0 %v276
        %311 = vmatpush.bf16.msra.mxu0 %v275
        %312 = vmatmul.bf16.gmra.mxu0 %v281
        %v313 = vpop.f32.mrf.mxu0
        %v314 = vadd.f32 %v249, %v313
        %v315 = vpop.f32.mrf.mxu0
        %v316 = vadd.f32 %v249, %v315
        %317 = vmatmul.bf16.gmra.mxu0 %v284
        %v318 = vpop.f32.mrf.mxu0
        %v319 = vadd.f32 %v249, %v318
        %v320 = vpop.f32.mrf.mxu0
        %v321 = vadd.f32 %v249, %v320
        %322 = vmatmul.bf16.gmra.mxu0 %v287
        %v323 = vpop.f32.mrf.mxu0
        %v324 = vadd.f32 %v249, %v323
        %v325 = vpop.f32.mrf.mxu0
        %v326 = vadd.f32 %v249, %v325
        %327 = vmatmul.bf16.gmra.mxu0 %v290
        %v328 = vpop.f32.mrf.mxu0
        %v329 = vadd.f32 %v249, %v328
        %v330 = vpop.f32.mrf.mxu0
        %v331 = vadd.f32 %v249, %v330
        %332 = vmatmul.bf16.gmra.mxu0 %v293
        %v333 = vpop.f32.mrf.mxu0
        %v334 = vadd.f32 %v249, %v333
        %v335 = vpop.f32.mrf.mxu0
        %v336 = vadd.f32 %v249, %v335
        %337 = vmatmul.bf16.gmra.mxu0 %v296
        %v338 = vpop.f32.mrf.mxu0
        %v339 = vadd.f32 %v249, %v338
        %v340 = vpop.f32.mrf.mxu0
        %v341 = vadd.f32 %v249, %v340
        %342 = vmatmul.bf16.gmra.mxu0 %v299
        %v343 = vpop.f32.mrf.mxu0
        %v344 = vadd.f32 %v249, %v343
        %v345 = vpop.f32.mrf.mxu0
        %v346 = vadd.f32 %v249, %v345
        %347 = vmatmul.bf16.gmra.mxu0 %v302
        %v348 = vpop.f32.mrf.mxu0
        %v349 = vadd.f32 %v249, %v348
        %v350 = vpop.f32.mrf.mxu0
        %v351 = vadd.f32 %v249, %v350
        %352 = vdwg.mxu0
        %v353 = vmul.f32 %v314, 0.35355338
        %v354 = vmul.f32 %v316, 0.35355338
        %v355 = vmul.f32 %v319, 0.35355338
        %v356 = vmul.f32 %v321, 0.35355338
        %v357 = vmul.f32 %v324, 0.35355338
        %v358 = vmul.f32 %v326, 0.35355338
        %v359 = vmul.f32 %v329, 0.35355338
        %v360 = vmul.f32 %v331, 0.35355338
        %v361 = vmul.f32 %v334, 0.35355338
        %v362 = vmul.f32 %v336, 0.35355338
        %v363 = vmul.f32 %v339, 0.35355338
        %v364 = vmul.f32 %v341, 0.35355338
        %v365 = vmul.f32 %v344, 0.35355338
        %v366 = vmul.f32 %v346, 0.35355338
        %v367 = vmul.f32 %v349, 0.35355338
        %v368 = vmul.f32 %v351, 0.35355338
        %v369 = vpack.c.bf16 %v353, %v353
        %v370 = vpack.c.bf16 %v354, %v354
        %v371 = vpack.c.bf16 %v355, %v355
        %v372 = vpack.c.bf16 %v356, %v356
        %v373 = vpack.c.bf16 %v357, %v357
        %v374 = vpack.c.bf16 %v358, %v358
        %v375 = vpack.c.bf16 %v359, %v359
        %v376 = vpack.c.bf16 %v360, %v360
        %v377 = vpack.c.bf16 %v361, %v361
        %v378 = vpack.c.bf16 %v362, %v362
        %v379 = vpack.c.bf16 %v363, %v363
        %v380 = vpack.c.bf16 %v364, %v364
        %v381 = vpack.c.bf16 %v365, %v365
        %v382 = vpack.c.bf16 %v366, %v366
        %v383 = vpack.c.bf16 %v367, %v367
        %v384 = vpack.c.bf16 %v368, %v368
        %vm385 = vcmask 257024
        %386 = vst.msk [vmem:[%s234] sm:$0xf] %vm385, %v369
        %387 = vst.msk [vmem:[%s234 + $0x4] sm:$0xf] %vm385, %v370
        %388 = vst.msk [vmem:[%s234 + $0x8] sm:$0xf] %vm385, %v371
        %389 = vst.msk [vmem:[%s234 + $0xc] sm:$0xf] %vm385, %v372
        %390 = vst.msk [vmem:[%s234 + $0x10] sm:$0xf] %vm385, %v373
        %391 = vst.msk [vmem:[%s234 + $0x14] sm:$0xf] %vm385, %v374
        %392 = vst.msk [vmem:[%s234 + $0x18] sm:$0xf] %vm385, %v375
        %393 = vst.msk [vmem:[%s234 + $0x1c] sm:$0xf] %vm385, %v376
        %394 = vst.msk [vmem:[%s234 + $0x20] sm:$0xf] %vm385, %v377
        %395 = vst.msk [vmem:[%s234 + $0x24] sm:$0xf] %vm385, %v378
        %396 = vst.msk [vmem:[%s234 + $0x28] sm:$0xf] %vm385, %v379
        %397 = vst.msk [vmem:[%s234 + $0x2c] sm:$0xf] %vm385, %v380
        %398 = vst.msk [vmem:[%s234 + $0x30] sm:$0xf] %vm385, %v381
        %399 = vst.msk [vmem:[%s234 + $0x34] sm:$0xf] %vm385, %v382
        %400 = vst.msk [vmem:[%s234 + $0x38] sm:$0xf] %vm385, %v383
        %401 = vst.msk [vmem:[%s234 + $0x3c] sm:$0xf] %vm385, %v384
        %s402 = smul.u32 16, %s23
        %p403 = scmp.lt.s32.totalorder %s22, 1
        %s404 = scalar_select %p403, %s22, 1
        %p405 = scmp.lt.s32.totalorder %s402, 15
        %s406 = scalar_select %p405, %s402, 15
        %s407 = smul.addr %s404, 16
        %s408 = sadd.s32 %s406, %s407
        %s409 = smul.addr %s408, 4
        %s410 = scalar_lea.vmem %s3, %s409
        // Predicated region
        $region41: #{tpu_custom_call.1} parent=31 // pred_check
          %p411 = pneg %p120
        $region42: #{tpu_custom_call.1} parent=31 // pred_check_branch
          %413 = sbr.rel (%p411) target = $region44
        $region43: #{tpu_custom_call.1} parent=31 // pred_region
          %s414 = smul.u32 16, %s23
        $region44: #{tpu_custom_call.1} parent=31 // pred_fallthru
          _
      $region32: #{tpu_custom_call.1} parent=5 // pred_fallthru
        _
      %p415 = scmp.le.s32.totalorder 2, %s13
      // Predicated region
      $region45: #{tpu_custom_call.1} parent=5 // pred_check
        %p416 = pneg %p415
      $region46: #{tpu_custom_call.1} parent=5 // pred_check_branch
        %418 = sbr.rel (%p416) target = $region48
      $region47: #{tpu_custom_call.1} parent=5 // pred_region
        %s419 = ssub.s32 %s13, 2
        // Predicated region
        $region49: #{tpu_custom_call.1} parent=47 // pred_check
          %p420 = pneg %p126
        $region50: #{tpu_custom_call.1} parent=47 // pred_check_branch
          %422 = sbr.rel (%p420) target = $region52
        $region51: #{tpu_custom_call.1} parent=47 // pred_region
          %s423 = smul.u32 16, %s25
          %p424 = scmp.lt.s32.totalorder %s24, 1
          %s425 = scalar_select %p424, %s24, 1
          %p426 = scmp.lt.s32.totalorder %s423, 15
          %s427 = scalar_select %p426, %s423, 15
          %s428 = smul.addr %s425, 16
          %s429 = sadd.s32 %s427, %s428
          %s430 = smul.addr %s429, 4
          %s431 = scalar_lea.vmem %s3, %s430
        $region52: #{tpu_custom_call.1} parent=47 // pred_fallthru
          _
      $region48: #{tpu_custom_call.1} parent=5 // pred_fallthru
        _
    $region6: #{tpu_custom_call.1} parent=1 // loop_footer
      %s17 = sadd.s32 1, %s13
    $region7: #{tpu_custom_call.1} parent=1 // loop_footer_branch
      %12 = sbr.rel target = $region3
    $region8: #{tpu_custom_call.1} parent=1 // loop_exit
      _
    %432 = vsyncpa [#allocation3], 1
    %s433 = scalar_lea.sflag [#allocation3], 1
    %434 = vsyncpa %s433, 1
    %435 = vsyncpa [#allocation5], 1

</llo_original>
